<compile_context>
chip_gen: v6e
topology: v6e:2x2x1
jax: 0.10.0
libtpu: 0.0.40
codegen_flags: <defaults>
</compile_context>

<pallas_src>
import functools

import jax
import jax.numpy as jnp
from jax.experimental import pallas as pl
from jax.experimental.pallas import tpu as pltpu


def _mlp_kernel(x_ref, w1_ref, b1_ref, w2_ref, b2_ref, o_ref, *, approx_sigmoid):
    def sig(z):
        if approx_sigmoid:
            # EUP exp + EUP approx reciprocal: frees the VPU divide slot.
            return pl.reciprocal(1.0 + jnp.exp(-z), approx=True)
        return jax.nn.sigmoid(z)

    # hidden = sigmoid(x @ w1 + b1): MXU matmul, f32 accumulate, f32 epilogue.
    h = jnp.dot(x_ref[...], w1_ref[...], preferred_element_type=jnp.float32)
    h = sig(h + b1_ref[...])
    # Feed the second MXU pass in the weights' dtype (bf16 when prepared so).
    h = h.astype(w2_ref.dtype)
    # out = sigmoid(h @ w2 + b2)
    y = jnp.dot(h, w2_ref[...], preferred_element_type=jnp.float32)
    o_ref[...] = sig(y + b2_ref[...])


def _round_up(n, m):
    return ((n + m - 1) // m) * m


def prepare_params(w1, b1, w2, b2, compute_dtype=jnp.bfloat16):
    """One-time parameter prep (do NOT call per forward).

    Casts the matmul operands to the MXU compute dtype (bf16 recommended on
    v6e/v7x, f32 for exact parity); biases stay f32 since the bias-add and
    sigmoid always run in f32.
    """
    return (jnp.asarray(w1, compute_dtype),
            jnp.asarray(b1, jnp.float32).reshape(1, -1),
            jnp.asarray(w2, compute_dtype),
            jnp.asarray(b2, jnp.float32).reshape(1, -1))


@functools.partial(jax.jit, static_argnames=("block_b", "approx_sigmoid"))
def net_forward(x, w1, b1, w2, b2, *, block_b=1024, approx_sigmoid=False):
    """Forward pass of Net.

    x:  (B, D_in)
    w1: (D_in, H)   (pre-transposed vs. torch's linear1.weight), f32 or bf16
    b1: (1, H)      f32
    w2: (H, D_out)  (pre-transposed vs. torch's linear2.weight), f32 or bf16
    b2: (1, D_out)  f32
    """
    B, D_in = x.shape
    H = w1.shape[1]
    D_out = w2.shape[1]
    cdt = w1.dtype  # MXU compute dtype chosen at prepare_params() time

    SUB = 8
    bp = _round_up(B, SUB)
    tb = min(_round_up(block_b, SUB), bp)
    if bp >= 2 * SUB:
        # Keep >= 2 grid steps so v7x's two TensorCores both get batch work.
        tb = min(tb, max(SUB, (bp // 2 // SUB) * SUB))
    bp = _round_up(bp, tb)

    # Only a cheap sublane (row) pad when needed; no lane padding anywhere.
    xc = x.astype(cdt)
    if bp != B:
        xc = jnp.zeros((bp, D_in), cdt).at[:B].set(xc)

    # Explicit scoped-VMEM budget: double-buffered weights + x/out tiles,
    # plus intermediates and generous headroom.
    itemsize = jnp.dtype(cdt).itemsize
    footprint = (
        2 * (D_in * H + H * D_out) * itemsize   # weights (double-buffered)
        + 2 * (H + D_out) * 4                   # biases (f32)
        + 2 * tb * D_in * itemsize              # x tile (double-buffered)
        + 2 * tb * D_out * 4                    # out tile (double-buffered)
        + 4 * tb * (H + D_out) * 4              # intermediates / spill room
    )
    vmem_limit = int(min(footprint + (8 << 20), 48 << 20))

    grid = (bp // tb,)

    out = pl.pallas_call(
        functools.partial(_mlp_kernel, approx_sigmoid=approx_sigmoid),
        out_shape=jax.ShapeDtypeStruct((bp, D_out), jnp.float32),
        grid=grid,
        in_specs=[
            pl.BlockSpec((tb, D_in), lambda i: (i, 0)),     # x: batch-tiled
            pl.BlockSpec((D_in, H), lambda i: (0, 0)),      # w1: resident
            pl.BlockSpec((1, H), lambda i: (0, 0)),         # b1: resident
            pl.BlockSpec((H, D_out), lambda i: (0, 0)),     # w2: resident
            pl.BlockSpec((1, D_out), lambda i: (0, 0)),     # b2: resident
        ],
        out_specs=pl.BlockSpec((tb, D_out), lambda i: (i, 0)),
        compiler_params=pltpu.CompilerParams(
            dimension_semantics=("parallel",),
            vmem_limit_bytes=vmem_limit,
        ),
    )(xc, w1, b1, w2, b2)

    return out if bp == B else out[:B]


def init_params(key, D_in, H, D_out):
    """Deterministic init mirroring nn.Linear's U(-1/sqrt(fan_in), 1/sqrt(fan_in))."""
    k1, k2, k3, k4 = jax.random.split(key, 4)
    bound1 = 1.0 / jnp.sqrt(D_in)
    bound2 = 1.0 / jnp.sqrt(H)
    w1 = jax.random.uniform(k1, (D_in, H), jnp.float32, -bound1, bound1)
    b1 = jax.random.uniform(k2, (1, H), jnp.float32, -bound1, bound1)
    w2 = jax.random.uniform(k3, (H, D_out), jnp.float32, -bound2, bound2)
    b2 = jax.random.uniform(k4, (1, D_out), jnp.float32, -bound2, bound2)
    return w1, b1, w2, b2


if __name__ == "__main__":
    # Small shapes consistent with the module (D_in -> H -> D_out MLP).
    B, D_in, H, D_out = 8, 16, 32, 8

    key = jax.random.PRNGKey(0)
    kx, kp = jax.random.split(key)
    x = jax.random.normal(kx, (B, D_in), jnp.float32)
    w1, b1, w2, b2 = init_params(kp, D_in, H, D_out)

    # Pure-JAX reference (f32 end-to-end).
    ref = jax.nn.sigmoid(jax.nn.sigmoid(x @ w1 + b1) @ w2 + b2)

    # 1) Exact f32 path.
    p32 = prepare_params(w1, b1, w2, b2, compute_dtype=jnp.float32)
    out32 = jax.block_until_ready(net_forward(x, *p32))
    assert out32.shape == (B, D_out)
    assert jnp.allclose(out32, ref, atol=1e-5, rtol=1e-5)

    # 2) bf16 MXU operands (recommended default on v6e/v7x), looser tolerance.
    pbf = prepare_params(w1, b1, w2, b2)  # default compute_dtype=bfloat16
    outbf = jax.block_until_ready(net_forward(x, *pbf))
    assert jnp.allclose(outbf, ref, atol=2e-2, rtol=2e-2)

    # 3) EUP approx-sigmoid fast path.
    outfast = jax.block_until_ready(net_forward(x, *pbf, approx_sigmoid=True))
    assert jnp.allclose(outfast, ref, atol=2e-2, rtol=2e-2)

    # 4) Multi-step grid + row-padding path (B not a multiple of the tile).
    B2 = 20
    x2 = jax.random.normal(jax.random.PRNGKey(1), (B2, D_in), jnp.float32)
    ref2 = jax.nn.sigmoid(jax.nn.sigmoid(x2 @ w1 + b1) @ w2 + b2)
    out2 = jax.block_until_ready(net_forward(x2, *p32))
    assert out2.shape == (B2, D_out)
    assert jnp.allclose(out2, ref2, atol=1e-5, rtol=1e-5)

    print("KERNEL_OK")
</pallas_src>

<mosaic_0001>
module attributes {stable_mosaic.version = 11 : i64} {
  func.func @_mlp_kernel(%arg0: i32, %arg1: memref<8x16xf32, #tpu.memory_space<vmem>>, %arg2: memref<16x32xf32, #tpu.memory_space<vmem>>, %arg3: memref<1x32xf32, #tpu.memory_space<vmem>>, %arg4: memref<32x8xf32, #tpu.memory_space<vmem>>, %arg5: memref<1x8xf32, #tpu.memory_space<vmem>>, %arg6: memref<8x8xf32, #tpu.memory_space<vmem>>) attributes {dimension_semantics = [#tpu.dimension_semantics<parallel>], iteration_bounds = array<i64: 1>, scalar_prefetch = 0 : i64, scratch_operands = 0 : i64, tpu.core_type = #tpu.core_type<tc>, window_params = [{transform_indices = @transform_0, window_bounds = array<i64: 8, 16>}, {pipeline_mode = #tpu.pipeline_mode<synchronous>, transform_indices = @transform_1, window_bounds = array<i64: 16, 32>}, {pipeline_mode = #tpu.pipeline_mode<synchronous>, transform_indices = @transform_2, window_bounds = array<i64: 1, 32>}, {pipeline_mode = #tpu.pipeline_mode<synchronous>, transform_indices = @transform_3, window_bounds = array<i64: 32, 8>}, {pipeline_mode = #tpu.pipeline_mode<synchronous>, transform_indices = @transform_4, window_bounds = array<i64: 1, 8>}, {transform_indices = @transform_5, window_bounds = array<i64: 8, 8>}]} {
    %c0 = arith.constant 0 : index
    %c0_0 = arith.constant 0 : index
    %0 = vector.load %arg1[%c0, %c0_0] : memref<8x16xf32, #tpu.memory_space<vmem>>, vector<8x16xf32>
    %c0_1 = arith.constant 0 : index
    %c0_2 = arith.constant 0 : index
    %1 = vector.load %arg2[%c0_1, %c0_2] : memref<16x32xf32, #tpu.memory_space<vmem>>, vector<16x32xf32>
    %cst = arith.constant dense<0.000000e+00> : vector<8x32xf32>
    %2 = tpu.matmul %0, %1, %cst {dimension_numbers = #tpu.dot_dimension_numbers<[1], [0], [0], [1], [0, 0, 1, 1], [], []>} : vector<8x16xf32>, vector<16x32xf32>, vector<8x32xf32> -> vector<8x32xf32>
    %c0_3 = arith.constant 0 : index
    %c0_4 = arith.constant 0 : index
    %3 = vector.load %arg3[%c0_3, %c0_4] : memref<1x32xf32, #tpu.memory_space<vmem>>, vector<1x32xf32>
    %4 = vector.broadcast %3 : vector<1x32xf32> to vector<8x32xf32>
    %5 = arith.addf %2, %4 : vector<8x32xf32>
    %6 = arith.negf %5 : vector<8x32xf32>
    %7 = math.exp %6 : vector<8x32xf32>
    %cst_5 = arith.constant 1.000000e+00 : f32
    %8 = vector.broadcast %cst_5 : f32 to vector<8x32xf32>
    %9 = arith.addf %8, %7 : vector<8x32xf32>
    %10 = arith.divf %8, %9 : vector<8x32xf32>
    %c0_6 = arith.constant 0 : index
    %c0_7 = arith.constant 0 : index
    %11 = vector.load %arg4[%c0_6, %c0_7] : memref<32x8xf32, #tpu.memory_space<vmem>>, vector<32x8xf32>
    %cst_8 = arith.constant dense<0.000000e+00> : vector<8x8xf32>
    %12 = tpu.matmul %10, %11, %cst_8 {dimension_numbers = #tpu.dot_dimension_numbers<[1], [0], [0], [1], [0, 0, 1, 1], [], []>} : vector<8x32xf32>, vector<32x8xf32>, vector<8x8xf32> -> vector<8x8xf32>
    %c0_9 = arith.constant 0 : index
    %c0_10 = arith.constant 0 : index
    %13 = vector.load %arg5[%c0_9, %c0_10] : memref<1x8xf32, #tpu.memory_space<vmem>>, vector<1x8xf32>
    %14 = vector.broadcast %13 : vector<1x8xf32> to vector<8x8xf32>
    %15 = arith.addf %12, %14 : vector<8x8xf32>
    %16 = arith.negf %15 : vector<8x8xf32>
    %17 = math.exp %16 : vector<8x8xf32>
    %cst_11 = arith.constant 1.000000e+00 : f32
    %18 = vector.broadcast %cst_11 : f32 to vector<8x8xf32>
    %19 = arith.addf %18, %17 : vector<8x8xf32>
    %20 = arith.divf %18, %19 : vector<8x8xf32>
    %c0_12 = arith.constant 0 : index
    %c0_13 = arith.constant 0 : index
    %21 = vector.load %arg6[%c0_12, %c0_13] : memref<8x8xf32, #tpu.memory_space<vmem>>, vector<8x8xf32>
    tpu.vector_store %arg6[%c0_12, %c0_13], %20 {strides = array<i32>} : memref<8x8xf32, #tpu.memory_space<vmem>>, vector<8x8xf32>,
    return
  }
  func.func @transform_0(%arg0: i32) -> (i32, i32) {
    %c0_i32 = arith.constant 0 : i32
    %c0_i32_0 = arith.constant 0 : i32
    return %arg0, %c0_i32 : i32, i32
  }
  func.func @transform_1(%arg0: i32) -> (i32, i32) {
    %c0_i32 = arith.constant 0 : i32
    %c0_i32_0 = arith.constant 0 : i32
    %c0_i32_1 = arith.constant 0 : i32
    return %c0_i32, %c0_i32_0 : i32, i32
  }
  func.func @transform_2(%arg0: i32) -> (i32, i32) {
    %c0_i32 = arith.constant 0 : i32
    %c0_i32_0 = arith.constant 0 : i32
    %c0_i32_1 = arith.constant 0 : i32
    return %c0_i32, %c0_i32_0 : i32, i32
  }
  func.func @transform_3(%arg0: i32) -> (i32, i32) {
    %c0_i32 = arith.constant 0 : i32
    %c0_i32_0 = arith.constant 0 : i32
    %c0_i32_1 = arith.constant 0 : i32
    return %c0_i32, %c0_i32_0 : i32, i32
  }
  func.func @transform_4(%arg0: i32) -> (i32, i32) {
    %c0_i32 = arith.constant 0 : i32
    %c0_i32_0 = arith.constant 0 : i32
    %c0_i32_1 = arith.constant 0 : i32
    return %c0_i32, %c0_i32_0 : i32, i32
  }
  func.func @transform_5(%arg0: i32) -> (i32, i32) {
    %c0_i32 = arith.constant 0 : i32
    %c0_i32_0 = arith.constant 0 : i32
    return %arg0, %c0_i32 : i32, i32
  }
}

</mosaic_0001>

<llo_original>
// kernel: net_forward.1
$region0: #{net_forward.1}
  #allocation0 [shape = 'u32[]', space=smem, size = 0x4, offset = 0x4, fixed_abs, tag = 'smem constant byte address 0x4 - core index']
  #allocation1 [shape = 'u32[144,128]{1,0:T(1,128)}', space=vmem, size = 0x12000, scoped, tag = 'internal scratch']
  %s0 = inlined_call_operand.vmem [shape: f32[8,16], index: 0, kind: input, shape index: {}]
  %s1 = inlined_call_operand.vmem [shape: f32[16,32], index: 1, kind: input, shape index: {}]
  %s2 = inlined_call_operand.vmem [shape: f32[1,32], index: 2, kind: input, shape index: {}]
  %s3 = inlined_call_operand.vmem [shape: f32[32,8], index: 3, kind: input, shape index: {}]
  %s4 = inlined_call_operand.vmem [shape: f32[1,8], index: 4, kind: input, shape index: {}]
  %s5 = inlined_call_operand.hbm [shape: f32[8,8], index: 5, kind: output, shape index: {}]
  %s6 = sld [smem:[#allocation0]]
  $region30: #{net_forward.1} parent=0
    _
  %s8 = ssub.s32 1, %s6
  %s9 = scalar_select 0, %s8, %s6
  $region1: #{net_forward.1} parent=0
    #allocation2 [shape = 'u8[4096]{0}', space=vmem, size = 0x1000, scoped, tag = 'output window, operand 0, single buffered']
    #allocation3 [shape = 's32[1]{0}', space=sflag, size = 0x4, scoped, tag = 'scoped memory for net_forward.1']
    %10 = vsyncpa [#allocation3], 0
    // Predicated region
    $region2: #{net_forward.1} parent=1 // pred_check
      _
    $region3: #{net_forward.1} parent=1 // pred_check_branch
      %12 = sbr.rel (0) target = $region5
    $region4: #{net_forward.1} parent=1 // pred_region
      _
    $region5: #{net_forward.1} parent=1 // pred_fallthru
      _
    // Predicated region
    $region6: #{net_forward.1} parent=1 // pred_check
      _
    $region7: #{net_forward.1} parent=1 // pred_check_branch
      %14 = sbr.rel (0) target = $region9
    $region8: #{net_forward.1} parent=1 // pred_region
      _
    $region9: #{net_forward.1} parent=1 // pred_fallthru
      _
    // Predicated region
    $region10: #{net_forward.1} parent=1 // pred_check
      _
    $region11: #{net_forward.1} parent=1 // pred_check_branch
      %16 = sbr.rel (0) target = $region13
    $region12: #{net_forward.1} parent=1 // pred_region
      _
    $region13: #{net_forward.1} parent=1 // pred_fallthru
      _
    // Predicated region
    $region14: #{net_forward.1} parent=1 // pred_check
      _
    $region15: #{net_forward.1} parent=1 // pred_check_branch
      %18 = sbr.rel (0) target = $region17
    $region16: #{net_forward.1} parent=1 // pred_region
      _
    $region17: #{net_forward.1} parent=1 // pred_fallthru
      _
    // Predicated region
    $region18: #{net_forward.1} parent=1 // pred_check
      _
    $region19: #{net_forward.1} parent=1 // pred_check_branch
      %20 = sbr.rel (0) target = $region21
    $region20: #{net_forward.1} parent=1 // pred_region
      _
    $region21: #{net_forward.1} parent=1 // pred_fallthru
      _
    %v21 = vld [vmem:[%s0] sm:$0xff]
    %v22 = vld [vmem:[%s1] sm:$0xff]
    %v23 = vld [vmem:[%s1 + $0x8] sm:$0xff]
    %v24 = vld [vmem:[%s2] sm:$0x1]
    %v26 = vlaneseq
    %v27 = vshrl.u32 %v26, 7
    %v28 = vsub.s32 0, %v27
    %v29 = vrot.slane %v24, %v28
    %vm31 = vcmask 130048
    %v33 = vsel %vm31, %v21, 0
    %35 = vmatprep.subr.mxu0 0.0
    %36 = vmatpush1.msra.mxu0 0.0
    %37 = vmatprep.subr.mxu0 0.0
    %38 = vmatpush1.msra.mxu0 0.0
    %39 = vmatprep.subr.mxu0 0.0
    %40 = vmatpush1.msra.mxu0 0.0
    %41 = vmatprep.subr.mxu0 0.0
    %42 = vmatpush1.msra.mxu0 0.0
    %43 = vmatprep.subr.mxu0 0.0
    %44 = vmatpush1.msra.mxu0 0.0
    %45 = vmatprep.subr.mxu0 0.0
    %46 = vmatpush1.msra.mxu0 0.0
    %47 = vmatprep.subr.mxu0 0.0
    %48 = vmatpush1.msra.mxu0 0.0
    %49 = vmatprep.subr.mxu0 0.0
    %50 = vmatpush1.msra.mxu0 0.0
    %51 = vmatprep.subr.mxu0 0.0
    %52 = vmatpush1.msra.mxu0 0.0
    %53 = vmatprep.subr.mxu0 0.0
    %54 = vmatpush1.msra.mxu0 0.0
    %55 = vmatprep.subr.mxu0 0.0
    %56 = vmatpush1.msra.mxu0 0.0
    %57 = vmatprep.subr.mxu0 0.0
    %58 = vmatpush1.msra.mxu0 0.0
    %59 = vmatprep.subr.mxu0 0.0
    %60 = vmatpush1.msra.mxu0 0.0
    %61 = vmatprep.subr.mxu0 0.0
    %62 = vmatpush1.msra.mxu0 0.0
    %63 = vmatprep.subr.mxu0 0.0
    %64 = vmatpush1.msra.mxu0 %v23
    %65 = vmatprep.subr.mxu0 0.0
    %66 = vmatpush1.msra.mxu0 %v22
    %67 = vmatprep.subr.mxu0 0.0
    %68 = vmatpush2.msra.mxu0 0.0
    %69 = vmatprep.subr.mxu0 0.0
    %70 = vmatpush2.msra.mxu0 0.0
    %71 = vmatprep.subr.mxu0 0.0
    %72 = vmatpush2.msra.mxu0 0.0
    %73 = vmatprep.subr.mxu0 0.0
    %74 = vmatpush2.msra.mxu0 0.0
    %75 = vmatprep.subr.mxu0 0.0
    %76 = vmatpush2.msra.mxu0 0.0
    %77 = vmatprep.subr.mxu0 0.0
    %78 = vmatpush2.msra.mxu0 0.0
    %79 = vmatprep.subr.mxu0 0.0
    %80 = vmatpush2.msra.mxu0 0.0
    %81 = vmatprep.subr.mxu0 0.0
    %82 = vmatpush2.msra.mxu0 0.0
    %83 = vmatprep.subr.mxu0 0.0
    %84 = vmatpush2.msra.mxu0 0.0
    %85 = vmatprep.subr.mxu0 0.0
    %86 = vmatpush2.msra.mxu0 0.0
    %87 = vmatprep.subr.mxu0 0.0
    %88 = vmatpush2.msra.mxu0 0.0
    %89 = vmatprep.subr.mxu0 0.0
    %90 = vmatpush2.msra.mxu0 0.0
    %91 = vmatprep.subr.mxu0 0.0
    %92 = vmatpush2.msra.mxu0 0.0
    %93 = vmatprep.subr.mxu0 0.0
    %94 = vmatpush2.msra.mxu0 0.0
    %95 = vmatprep.subr.mxu0 0.0
    %96 = vmatpush2.msra.mxu0 0.0
    %97 = vmatprep.subr.mxu0 0.0
    %98 = vmatpush2.msra.mxu0 0.0
    %99 = vmatprep.mubr.f32.mxu0 0.0
    %100 = vmatmul.mubr.f32.gmra.mxu0 %v33
    %v101 = vpop.f32.mrf.mxu0
    %v102 = vadd.f32 %v29, %v101
    %v103 = vpop.f32.mrf.mxu0
    %104 = vdwg.mxu0
    %v105 = vxor.u32 %v102, 2147483648
    %v106 = vmul.f32 %v105, 1.442695
    %v107 = vpow.pop %v106
    %v108 = vadd.f32 %v107, 1.0
    %v109 = vrcp.pop %v108
    %v110 = vmul.f32 1.0, %v109
    %v111 = vld [vmem:[%s3] sm:$0xff]
    %v112 = vld [vmem:[%s3 + $0x8] sm:$0xff]
    %v113 = vld [vmem:[%s3 + $0x10] sm:$0xff]
    %v114 = vld [vmem:[%s3 + $0x18] sm:$0xff]
    %v115 = vld [vmem:[%s4] sm:$0x1]
    %v117 = vlaneseq
    %v118 = vshrl.u32 %v117, 7
    %v119 = vsub.s32 0, %v118
    %v120 = vrot.slane %v115, %v119
    %vm122 = vcmask 261120
    %v124 = vsel %vm122, %v110, 0
    %126 = vmatprep.subr.mxu0 0.0
    %127 = vmatpush1.msra.mxu0 0.0
    %128 = vmatprep.subr.mxu0 0.0
    %129 = vmatpush1.msra.mxu0 0.0
    %130 = vmatprep.subr.mxu0 0.0
    %131 = vmatpush1.msra.mxu0 0.0
    %132 = vmatprep.subr.mxu0 0.0
    %133 = vmatpush1.msra.mxu0 0.0
    %134 = vmatprep.subr.mxu0 0.0
    %135 = vmatpush1.msra.mxu0 0.0
    %136 = vmatprep.subr.mxu0 0.0
    %137 = vmatpush1.msra.mxu0 0.0
    %138 = vmatprep.subr.mxu0 0.0
    %139 = vmatpush1.msra.mxu0 0.0
    %140 = vmatprep.subr.mxu0 0.0
    %141 = vmatpush1.msra.mxu0 0.0
    %142 = vmatprep.subr.mxu0 0.0
    %143 = vmatpush1.msra.mxu0 0.0
    %144 = vmatprep.subr.mxu0 0.0
    %145 = vmatpush1.msra.mxu0 0.0
    %146 = vmatprep.subr.mxu0 0.0
    %147 = vmatpush1.msra.mxu0 0.0
    %148 = vmatprep.subr.mxu0 0.0
    %149 = vmatpush1.msra.mxu0 0.0
    %150 = vmatprep.subr.mxu0 0.0
    %151 = vmatpush1.msra.mxu0 %v114
    %152 = vmatprep.subr.mxu0 0.0
    %153 = vmatpush1.msra.mxu0 %v113
    %154 = vmatprep.subr.mxu0 0.0
    %155 = vmatpush1.msra.mxu0 %v112
    %156 = vmatprep.subr.mxu0 0.0
    %157 = vmatpush1.msra.mxu0 %v111
    %158 = vmatprep.subr.mxu0 0.0
    %159 = vmatpush2.msra.mxu0 0.0
    %160 = vmatprep.subr.mxu0 0.0
    %161 = vmatpush2.msra.mxu0 0.0
    %162 = vmatprep.subr.mxu0 0.0
    %163 = vmatpush2.msra.mxu0 0.0
    %164 = vmatprep.subr.mxu0 0.0
    %165 = vmatpush2.msra.mxu0 0.0
    %166 = vmatprep.subr.mxu0 0.0
    %167 = vmatpush2.msra.mxu0 0.0
    %168 = vmatprep.subr.mxu0 0.0
    %169 = vmatpush2.msra.mxu0 0.0
    %170 = vmatprep.subr.mxu0 0.0
    %171 = vmatpush2.msra.mxu0 0.0
    %172 = vmatprep.subr.mxu0 0.0
    %173 = vmatpush2.msra.mxu0 0.0
    %174 = vmatprep.subr.mxu0 0.0
    %175 = vmatpush2.msra.mxu0 0.0
    %176 = vmatprep.subr.mxu0 0.0
    %177 = vmatpush2.msra.mxu0 0.0
    %178 = vmatprep.subr.mxu0 0.0
    %179 = vmatpush2.msra.mxu0 0.0
    %180 = vmatprep.subr.mxu0 0.0
    %181 = vmatpush2.msra.mxu0 0.0
    %182 = vmatprep.subr.mxu0 0.0
    %183 = vmatpush2.msra.mxu0 0.0
    %184 = vmatprep.subr.mxu0 0.0
    %185 = vmatpush2.msra.mxu0 0.0
    %186 = vmatprep.subr.mxu0 0.0
    %187 = vmatpush2.msra.mxu0 0.0
    %188 = vmatprep.subr.mxu0 0.0
    %189 = vmatpush2.msra.mxu0 0.0
    %190 = vmatprep.mubr.f32.mxu0 0.0
    %191 = vmatmul.mubr.f32.gmra.mxu0 %v124
    %v192 = vpop.f32.mrf.mxu0
    %v193 = vadd.f32 %v120, %v192
    %v194 = vpop.f32.mrf.mxu0
    %195 = vdwg.mxu0
    %v196 = vxor.u32 %v193, 2147483648
    %v197 = vmul.f32 %v196, 1.442695
    %v198 = vpow.pop %v197
    %v199 = vadd.f32 %v198, 1.0
    %v200 = vrcp.pop %v199
    %v201 = vmul.f32 1.0, %v200
    %vm202 = vcmask 64512
    %203 = vst.msk [vmem:[#allocation2] sm:$0xff] %vm202, %v201
    // Predicated region
    $region22: #{net_forward.1} parent=1 // pred_check
      _
    $region23: #{net_forward.1} parent=1 // pred_check_branch
      %205 = sbr.rel (0) target = $region25
    $region24: #{net_forward.1} parent=1 // pred_region
      %s207 = ssub.s32 128, 128
      %208 = vsyncadd [#allocation3], %s207
      %s210 = sshll.u32 [#allocation2], 4
      %s211 = int_to_ptr.vmem [resolvable:$true] %s210
      %213 = dma.vmem_to_hbm [thread:$0]  %s211, 128, %s5, [#allocation3]
    $region25: #{net_forward.1} parent=1 // pred_fallthru
      _
    // Predicated region
    $region26: #{net_forward.1} parent=1 // pred_check
      _
    $region27: #{net_forward.1} parent=1 // pred_check_branch
      %215 = sbr.rel (0) target = $region29
    $region28: #{net_forward.1} parent=1 // pred_region
      %216 = dma.done [#allocation3], 128
    $region29: #{net_forward.1} parent=1 // pred_fallthru
      _
    %217 = vsyncpa [#allocation3], 1

</llo_original>
